<compile_context>
chip_gen: v5e
topology: v5e:2x2
jax: 0.10.0
libtpu: 0.0.40
codegen_flags: <defaults>
</compile_context>

<pallas_src>
import math

import jax
import jax.numpy as jnp
from jax.experimental import pallas as pl
from jax.experimental.pallas import tpu as pltpu  # noqa: F401

# ---- model hyperparameters (small, consistent with the module) ----
B = 2          # batch
T = 8          # sequence length (block_size)
C = 32         # n_embd
H = 4          # num_heads
D = 8          # head_size
HD = H * D
DTYPE = jnp.float32


def mha_kernel(x_ref, wqkv_ref, wproj_ref, bproj_ref, out_ref, *attn_refs):
    """Single-invocation MHA: one fused QKV matmul, per-(batch, head) softmax
    attention, one concat output projection.  Each output ref is written once
    as a whole slab (no masked partial stores)."""
    attn_ref = attn_refs[0] if attn_refs else None

    x = x_ref[...]              # (B*T, C)
    wqkv = wqkv_ref[...]        # (C, 3*H*D)   -- Q block pre-scaled by D**-0.5
    wproj = wproj_ref[...]      # (H*D, C)
    bias = bproj_ref[...]       # (1, C)

    # One lane-dense projection for all heads of Q, K and V (single MXU push).
    qkv = jnp.dot(x, wqkv, preferred_element_type=jnp.float32)   # (B*T, 3*H*D)

    out_rows = []               # per-batch (T, H*D) concat of head outputs
    attn_rows = []              # per-batch (T, H*T) attention slab rows
    for b in range(B):                      # static unroll over tiny tiles
        r0, r1 = b * T, (b + 1) * T
        o_heads = []
        w_heads = []
        for h in range(H):
            c0, c1 = h * D, (h + 1) * D
            q_bh = qkv[r0:r1, c0:c1]                        # (T, D), pre-scaled
            k_bh = qkv[r0:r1, HD + c0:HD + c1]              # (T, D)
            v_bh = qkv[r0:r1, 2 * HD + c0:2 * HD + c1]      # (T, D)

            # logits = (x Wq * D^-0.5) (x Wk)^T   (scale folded into Wq)
            s = jnp.einsum('td,sd->ts', q_bh, k_bh,
                           preferred_element_type=jnp.float32)      # (T, T)
            s = s - jnp.max(s, axis=-1, keepdims=True)
            e = jnp.exp(s)
            inv_l = pl.reciprocal(jnp.sum(e, axis=-1, keepdims=True),
                                  approx=False)                      # (T, 1)

            if attn_ref is not None:
                w = e * inv_l                                        # (T, T)
                w_heads.append(w)
                o = jnp.dot(w, v_bh, preferred_element_type=jnp.float32)
            else:
                # Deferred normalization: (e @ v) * 1/l saves one (T,T) VPU
                # multiply per head when attention maps are not materialized.
                o = jnp.dot(e, v_bh,
                            preferred_element_type=jnp.float32) * inv_l
            o_heads.append(o)                                        # (T, D)

        out_rows.append(jnp.concatenate(o_heads, axis=-1))           # (T, H*D)
        if attn_ref is not None:
            attn_rows.append(jnp.concatenate(w_heads, axis=-1))      # (T, H*T)

    # One concat projection replaces B*H tiny per-head matmul+accumulate steps:
    #   cat @ Wp == sum_h o_h @ Wp[h*D:(h+1)*D]
    cat = jnp.concatenate(out_rows, axis=0)                          # (B*T, H*D)
    out = jnp.dot(cat, wproj, preferred_element_type=jnp.float32) + bias
    out_ref[...] = out.astype(out_ref.dtype)                         # one store

    if attn_ref is not None:                                         # one store
        attn_ref[...] = jnp.concatenate(attn_rows, axis=0).astype(attn_ref.dtype)
    # TODO(synk): dropout=True path (nn.Dropout(0.3)) not implemented; the
    # default forward path (dropout disabled) is reproduced exactly.


def pack_mha_params(wq, wk, wv, wproj, bproj):
    """One-time parameter packing.  Do this once per parameter set and cache
    the result; it is deliberately NOT part of the per-forward path.
    wq/wk/wv: (H, C, D); wproj: (H*D, C); bproj: (1, C)."""
    def heads_to_cols(w):                         # (H, C, D) -> (C, H*D)
        return jnp.transpose(w, (1, 0, 2)).reshape(C, H * D)

    wqkv = jnp.concatenate(
        [heads_to_cols(wq * (D ** -0.5)), heads_to_cols(wk), heads_to_cols(wv)],
        axis=1)                                   # (C, 3*H*D), Q block pre-scaled
    return wqkv, wproj, bproj


def multi_head_attention(x, packed_params, *, return_attention=True):
    """x: (B, T, C); packed_params from pack_mha_params().

    Returns out (B, T, C) and, if requested, the attention slab of shape
    (B*T, H*T): rows index (batch, query-pos), lanes index (head, key-pos).
    The slab is returned exactly as the kernel writes it, so there is no
    per-call re-layout; reshape/transpose on the consumer side if the
    (B, H, T, T) view is needed."""
    wqkv, wproj, bproj = packed_params
    assert x.shape == (B, T, C), f"expected {(B, T, C)}, got {x.shape}"

    x2 = x.reshape(B * T, C)                      # free (contiguous) reshape

    out_shape = [jax.ShapeDtypeStruct((B * T, C), DTYPE)]
    if return_attention:
        out_shape.append(jax.ShapeDtypeStruct((B * T, H * T), DTYPE))

    res = pl.pallas_call(
        mha_kernel,
        out_shape=tuple(out_shape),
        # No grid: the whole (tiny, ~25 KiB) problem is VMEM-resident in one
        # invocation.  At real model sizes, switch to a row-tiled grid over
        # B*T (sublane-multiple tiles, full C in lanes) with
        # dimension_semantics=("parallel",) so v7x's two TensorCores share it,
        # and set vmem_limit_bytes for the smaller v7x VMEM.
    )(x2, wqkv, wproj, bproj)

    out = res[0].reshape(B, T, C)
    if not return_attention:
        return out
    return out, res[1]


def reference(x, wq, wk, wv, wproj, bproj):
    """Pure-JAX reference mirroring the PyTorch forward (dropout disabled)."""
    q = jnp.einsum('btc,hcd->bhtd', x, wq)
    k = jnp.einsum('btc,hcd->bhtd', x, wk)
    v = jnp.einsum('btc,hcd->bhtd', x, wv)
    wei = jnp.einsum('bhtd,bhsd->bhts', q, k) * (D ** -0.5)
    wei = jax.nn.softmax(wei, axis=-1)
    out_h = jnp.einsum('bhts,bhsd->bhtd', wei, v)
    cat = out_h.transpose(0, 2, 1, 3).reshape(B, T, H * D)
    return cat @ wproj + bproj[0], wei


if __name__ == "__main__":
    key = jax.random.PRNGKey(0)
    kx, kq, kk, kv, kp, kb = jax.random.split(key, 6)

    x = jax.random.normal(kx, (B, T, C), dtype=DTYPE)

    # Per-head linear weights (no bias), stacked & pre-transposed to (H, C, D).
    init_scale = 1.0 / math.sqrt(C)
    wq = jax.random.normal(kq, (H, C, D), dtype=DTYPE) * init_scale
    wk = jax.random.normal(kk, (H, C, D), dtype=DTYPE) * init_scale
    wv = jax.random.normal(kv, (H, C, D), dtype=DTYPE) * init_scale

    # Output projection nn.Linear(H*D, C): weight^T is (H*D, C), bias (1, C).
    wproj = jax.random.normal(kp, (H * D, C), dtype=DTYPE) / math.sqrt(H * D)
    bproj = jax.random.normal(kb, (1, C), dtype=DTYPE) * 0.01

    # One-time parameter prep (cached across forwards in a real model).
    packed = pack_mha_params(wq, wk, wv, wproj, bproj)
    packed = jax.tree_util.tree_map(jax.block_until_ready, packed)

    out, attn_slab = multi_head_attention(x, packed, return_attention=True)
    jax.block_until_ready((out, attn_slab))

    ref_out, ref_attn = reference(x, wq, wk, wv, wproj, bproj)
    # Test-side re-layout of the *reference* to the kernel's slab layout.
    ref_slab = ref_attn.transpose(0, 2, 1, 3).reshape(B * T, H * T)

    assert jnp.allclose(out, ref_out, atol=1e-5, rtol=1e-5), "output mismatch"
    assert jnp.allclose(attn_slab, ref_slab, atol=1e-5, rtol=1e-5), "attn mismatch"
    assert jnp.allclose(attn_slab.reshape(B * T, H, T).sum(axis=-1), 1.0,
                        atol=1e-5), "softmax rows must sum to 1"

    # Attention-maps-optional path (deferred normalization, half the writeback).
    out_only = multi_head_attention(x, packed, return_attention=False)
    jax.block_until_ready(out_only)
    assert jnp.allclose(out_only, ref_out, atol=1e-5, rtol=1e-5), \
        "output mismatch (no-attention path)"

    print("KERNEL_OK")
</pallas_src>

<mosaic_0001>
module attributes {stable_mosaic.version = 11 : i64} {
  func.func @mha_kernel(%arg0: memref<16x32xf32, #tpu.memory_space<vmem>>, %arg1: memref<32x96xf32, #tpu.memory_space<vmem>>, %arg2: memref<32x32xf32, #tpu.memory_space<vmem>>, %arg3: memref<1x32xf32, #tpu.memory_space<vmem>>, %arg4: memref<16x32xf32, #tpu.memory_space<vmem>>, %arg5: memref<16x32xf32, #tpu.memory_space<vmem>>) attributes {dimension_semantics = [], scalar_prefetch = 0 : i64, scratch_operands = 0 : i64, tpu.core_type = #tpu.core_type<tc>} {
    %c0 = arith.constant 0 : index
    %c0_0 = arith.constant 0 : index
    %0 = vector.load %arg0[%c0, %c0_0] : memref<16x32xf32, #tpu.memory_space<vmem>>, vector<16x32xf32>
    %c0_1 = arith.constant 0 : index
    %c0_2 = arith.constant 0 : index
    %1 = vector.load %arg1[%c0_1, %c0_2] : memref<32x96xf32, #tpu.memory_space<vmem>>, vector<32x96xf32>
    %c0_3 = arith.constant 0 : index
    %c0_4 = arith.constant 0 : index
    %2 = vector.load %arg2[%c0_3, %c0_4] : memref<32x32xf32, #tpu.memory_space<vmem>>, vector<32x32xf32>
    %c0_5 = arith.constant 0 : index
    %c0_6 = arith.constant 0 : index
    %3 = vector.load %arg3[%c0_5, %c0_6] : memref<1x32xf32, #tpu.memory_space<vmem>>, vector<1x32xf32>
    %cst = arith.constant dense<0.000000e+00> : vector<16x96xf32>
    %4 = tpu.matmul %0, %1, %cst {dimension_numbers = #tpu.dot_dimension_numbers<[1], [0], [0], [1], [0, 0, 1, 1], [], []>} : vector<16x32xf32>, vector<32x96xf32>, vector<16x96xf32> -> vector<16x96xf32>
    %5 = vector.extract_strided_slice %4 {offsets = [0, 0], sizes = [8, 8], strides = [1, 1]} : vector<16x96xf32> to vector<8x8xf32>
    %6 = vector.extract_strided_slice %4 {offsets = [0, 32], sizes = [8, 8], strides = [1, 1]} : vector<16x96xf32> to vector<8x8xf32>
    %7 = vector.extract_strided_slice %4 {offsets = [0, 64], sizes = [8, 8], strides = [1, 1]} : vector<16x96xf32> to vector<8x8xf32>
    "tpu.trace_start"() <{level = 10 : i32, message = "td,sd->ts"}> : () -> ()
    %cst_7 = arith.constant dense<0.000000e+00> : vector<8x8xf32>
    %8 = tpu.matmul %5, %6, %cst_7 {dimension_numbers = #tpu.dot_dimension_numbers<[1], [1], [0], [0], [0, 0, 1, 0], [], []>} : vector<8x8xf32>, vector<8x8xf32>, vector<8x8xf32> -> vector<8x8xf32>
    "tpu.trace_stop"() : () -> ()
    %cst_8 = arith.constant dense<0xFF800000> : vector<8xf32>
    %9 = vector.multi_reduction <maximumf>, %8, %cst_8 [1] : vector<8x8xf32> to vector<8xf32>
    %10 = vector.shape_cast %9 : vector<8xf32> to vector<8x1xf32>
    %11 = vector.broadcast %10 : vector<8x1xf32> to vector<8x8xf32>
    %12 = arith.subf %8, %11 : vector<8x8xf32>
    %13 = math.exp %12 : vector<8x8xf32>
    %cst_9 = arith.constant dense<0.000000e+00> : vector<8xf32>
    %14 = vector.multi_reduction <add>, %13, %cst_9 [1] : vector<8x8xf32> to vector<8xf32>
    %15 = vector.shape_cast %14 : vector<8xf32> to vector<8x1xf32>
    %16 = tpu.reciprocal %15 : vector<8x1xf32> -> vector<8x1xf32>
    %17 = vector.broadcast %16 : vector<8x1xf32> to vector<8x8xf32>
    %18 = arith.mulf %13, %17 : vector<8x8xf32>
    %cst_10 = arith.constant dense<0.000000e+00> : vector<8x8xf32>
    %19 = tpu.matmul %18, %7, %cst_10 {dimension_numbers = #tpu.dot_dimension_numbers<[1], [0], [0], [1], [0, 0, 1, 1], [], []>} : vector<8x8xf32>, vector<8x8xf32>, vector<8x8xf32> -> vector<8x8xf32>
    %20 = vector.extract_strided_slice %4 {offsets = [0, 8], sizes = [8, 8], strides = [1, 1]} : vector<16x96xf32> to vector<8x8xf32>
    %21 = vector.extract_strided_slice %4 {offsets = [0, 40], sizes = [8, 8], strides = [1, 1]} : vector<16x96xf32> to vector<8x8xf32>
    %22 = vector.extract_strided_slice %4 {offsets = [0, 72], sizes = [8, 8], strides = [1, 1]} : vector<16x96xf32> to vector<8x8xf32>
    "tpu.trace_start"() <{level = 10 : i32, message = "td,sd->ts"}> : () -> ()
    %cst_11 = arith.constant dense<0.000000e+00> : vector<8x8xf32>
    %23 = tpu.matmul %20, %21, %cst_11 {dimension_numbers = #tpu.dot_dimension_numbers<[1], [1], [0], [0], [0, 0, 1, 0], [], []>} : vector<8x8xf32>, vector<8x8xf32>, vector<8x8xf32> -> vector<8x8xf32>
    "tpu.trace_stop"() : () -> ()
    %cst_12 = arith.constant dense<0xFF800000> : vector<8xf32>
    %24 = vector.multi_reduction <maximumf>, %23, %cst_12 [1] : vector<8x8xf32> to vector<8xf32>
    %25 = vector.shape_cast %24 : vector<8xf32> to vector<8x1xf32>
    %26 = vector.broadcast %25 : vector<8x1xf32> to vector<8x8xf32>
    %27 = arith.subf %23, %26 : vector<8x8xf32>
    %28 = math.exp %27 : vector<8x8xf32>
    %cst_13 = arith.constant dense<0.000000e+00> : vector<8xf32>
    %29 = vector.multi_reduction <add>, %28, %cst_13 [1] : vector<8x8xf32> to vector<8xf32>
    %30 = vector.shape_cast %29 : vector<8xf32> to vector<8x1xf32>
    %31 = tpu.reciprocal %30 : vector<8x1xf32> -> vector<8x1xf32>
    %32 = vector.broadcast %31 : vector<8x1xf32> to vector<8x8xf32>
    %33 = arith.mulf %28, %32 : vector<8x8xf32>
    %cst_14 = arith.constant dense<0.000000e+00> : vector<8x8xf32>
    %34 = tpu.matmul %33, %22, %cst_14 {dimension_numbers = #tpu.dot_dimension_numbers<[1], [0], [0], [1], [0, 0, 1, 1], [], []>} : vector<8x8xf32>, vector<8x8xf32>, vector<8x8xf32> -> vector<8x8xf32>
    %35 = vector.extract_strided_slice %4 {offsets = [0, 16], sizes = [8, 8], strides = [1, 1]} : vector<16x96xf32> to vector<8x8xf32>
    %36 = vector.extract_strided_slice %4 {offsets = [0, 48], sizes = [8, 8], strides = [1, 1]} : vector<16x96xf32> to vector<8x8xf32>
    %37 = vector.extract_strided_slice %4 {offsets = [0, 80], sizes = [8, 8], strides = [1, 1]} : vector<16x96xf32> to vector<8x8xf32>
    "tpu.trace_start"() <{level = 10 : i32, message = "td,sd->ts"}> : () -> ()
    %cst_15 = arith.constant dense<0.000000e+00> : vector<8x8xf32>
    %38 = tpu.matmul %35, %36, %cst_15 {dimension_numbers = #tpu.dot_dimension_numbers<[1], [1], [0], [0], [0, 0, 1, 0], [], []>} : vector<8x8xf32>, vector<8x8xf32>, vector<8x8xf32> -> vector<8x8xf32>
    "tpu.trace_stop"() : () -> ()
    %cst_16 = arith.constant dense<0xFF800000> : vector<8xf32>
    %39 = vector.multi_reduction <maximumf>, %38, %cst_16 [1] : vector<8x8xf32> to vector<8xf32>
    %40 = vector.shape_cast %39 : vector<8xf32> to vector<8x1xf32>
    %41 = vector.broadcast %40 : vector<8x1xf32> to vector<8x8xf32>
    %42 = arith.subf %38, %41 : vector<8x8xf32>
    %43 = math.exp %42 : vector<8x8xf32>
    %cst_17 = arith.constant dense<0.000000e+00> : vector<8xf32>
    %44 = vector.multi_reduction <add>, %43, %cst_17 [1] : vector<8x8xf32> to vector<8xf32>
    %45 = vector.shape_cast %44 : vector<8xf32> to vector<8x1xf32>
    %46 = tpu.reciprocal %45 : vector<8x1xf32> -> vector<8x1xf32>
    %47 = vector.broadcast %46 : vector<8x1xf32> to vector<8x8xf32>
    %48 = arith.mulf %43, %47 : vector<8x8xf32>
    %cst_18 = arith.constant dense<0.000000e+00> : vector<8x8xf32>
    %49 = tpu.matmul %48, %37, %cst_18 {dimension_numbers = #tpu.dot_dimension_numbers<[1], [0], [0], [1], [0, 0, 1, 1], [], []>} : vector<8x8xf32>, vector<8x8xf32>, vector<8x8xf32> -> vector<8x8xf32>
    %50 = vector.extract_strided_slice %4 {offsets = [0, 24], sizes = [8, 8], strides = [1, 1]} : vector<16x96xf32> to vector<8x8xf32>
    %51 = vector.extract_strided_slice %4 {offsets = [0, 56], sizes = [8, 8], strides = [1, 1]} : vector<16x96xf32> to vector<8x8xf32>
    %52 = vector.extract_strided_slice %4 {offsets = [0, 88], sizes = [8, 8], strides = [1, 1]} : vector<16x96xf32> to vector<8x8xf32>
    "tpu.trace_start"() <{level = 10 : i32, message = "td,sd->ts"}> : () -> ()
    %cst_19 = arith.constant dense<0.000000e+00> : vector<8x8xf32>
    %53 = tpu.matmul %50, %51, %cst_19 {dimension_numbers = #tpu.dot_dimension_numbers<[1], [1], [0], [0], [0, 0, 1, 0], [], []>} : vector<8x8xf32>, vector<8x8xf32>, vector<8x8xf32> -> vector<8x8xf32>
    "tpu.trace_stop"() : () -> ()
    %cst_20 = arith.constant dense<0xFF800000> : vector<8xf32>
    %54 = vector.multi_reduction <maximumf>, %53, %cst_20 [1] : vector<8x8xf32> to vector<8xf32>
    %55 = vector.shape_cast %54 : vector<8xf32> to vector<8x1xf32>
    %56 = vector.broadcast %55 : vector<8x1xf32> to vector<8x8xf32>
    %57 = arith.subf %53, %56 : vector<8x8xf32>
    %58 = math.exp %57 : vector<8x8xf32>
    %cst_21 = arith.constant dense<0.000000e+00> : vector<8xf32>
    %59 = vector.multi_reduction <add>, %58, %cst_21 [1] : vector<8x8xf32> to vector<8xf32>
    %60 = vector.shape_cast %59 : vector<8xf32> to vector<8x1xf32>
    %61 = tpu.reciprocal %60 : vector<8x1xf32> -> vector<8x1xf32>
    %62 = vector.broadcast %61 : vector<8x1xf32> to vector<8x8xf32>
    %63 = arith.mulf %58, %62 : vector<8x8xf32>
    %cst_22 = arith.constant dense<0.000000e+00> : vector<8x8xf32>
    %64 = tpu.matmul %63, %52, %cst_22 {dimension_numbers = #tpu.dot_dimension_numbers<[1], [0], [0], [1], [0, 0, 1, 1], [], []>} : vector<8x8xf32>, vector<8x8xf32>, vector<8x8xf32> -> vector<8x8xf32>
    %65 = tpu.concatenate %19, %34, %49, %64 in 1 : vector<8x8xf32>, vector<8x8xf32>, vector<8x8xf32>, vector<8x8xf32> -> vector<8x32xf32>
    %66 = tpu.concatenate %18, %33, %48, %63 in 1 : vector<8x8xf32>, vector<8x8xf32>, vector<8x8xf32>, vector<8x8xf32> -> vector<8x32xf32>
    %67 = vector.extract_strided_slice %4 {offsets = [8, 0], sizes = [8, 8], strides = [1, 1]} : vector<16x96xf32> to vector<8x8xf32>
    %68 = vector.extract_strided_slice %4 {offsets = [8, 32], sizes = [8, 8], strides = [1, 1]} : vector<16x96xf32> to vector<8x8xf32>
    %69 = vector.extract_strided_slice %4 {offsets = [8, 64], sizes = [8, 8], strides = [1, 1]} : vector<16x96xf32> to vector<8x8xf32>
    "tpu.trace_start"() <{level = 10 : i32, message = "td,sd->ts"}> : () -> ()
    %cst_23 = arith.constant dense<0.000000e+00> : vector<8x8xf32>
    %70 = tpu.matmul %67, %68, %cst_23 {dimension_numbers = #tpu.dot_dimension_numbers<[1], [1], [0], [0], [0, 0, 1, 0], [], []>} : vector<8x8xf32>, vector<8x8xf32>, vector<8x8xf32> -> vector<8x8xf32>
    "tpu.trace_stop"() : () -> ()
    %cst_24 = arith.constant dense<0xFF800000> : vector<8xf32>
    %71 = vector.multi_reduction <maximumf>, %70, %cst_24 [1] : vector<8x8xf32> to vector<8xf32>
    %72 = vector.shape_cast %71 : vector<8xf32> to vector<8x1xf32>
    %73 = vector.broadcast %72 : vector<8x1xf32> to vector<8x8xf32>
    %74 = arith.subf %70, %73 : vector<8x8xf32>
    %75 = math.exp %74 : vector<8x8xf32>
    %cst_25 = arith.constant dense<0.000000e+00> : vector<8xf32>
    %76 = vector.multi_reduction <add>, %75, %cst_25 [1] : vector<8x8xf32> to vector<8xf32>
    %77 = vector.shape_cast %76 : vector<8xf32> to vector<8x1xf32>
    %78 = tpu.reciprocal %77 : vector<8x1xf32> -> vector<8x1xf32>
    %79 = vector.broadcast %78 : vector<8x1xf32> to vector<8x8xf32>
    %80 = arith.mulf %75, %79 : vector<8x8xf32>
    %cst_26 = arith.constant dense<0.000000e+00> : vector<8x8xf32>
    %81 = tpu.matmul %80, %69, %cst_26 {dimension_numbers = #tpu.dot_dimension_numbers<[1], [0], [0], [1], [0, 0, 1, 1], [], []>} : vector<8x8xf32>, vector<8x8xf32>, vector<8x8xf32> -> vector<8x8xf32>
    %82 = vector.extract_strided_slice %4 {offsets = [8, 8], sizes = [8, 8], strides = [1, 1]} : vector<16x96xf32> to vector<8x8xf32>
    %83 = vector.extract_strided_slice %4 {offsets = [8, 40], sizes = [8, 8], strides = [1, 1]} : vector<16x96xf32> to vector<8x8xf32>
    %84 = vector.extract_strided_slice %4 {offsets = [8, 72], sizes = [8, 8], strides = [1, 1]} : vector<16x96xf32> to vector<8x8xf32>
    "tpu.trace_start"() <{level = 10 : i32, message = "td,sd->ts"}> : () -> ()
    %cst_27 = arith.constant dense<0.000000e+00> : vector<8x8xf32>
    %85 = tpu.matmul %82, %83, %cst_27 {dimension_numbers = #tpu.dot_dimension_numbers<[1], [1], [0], [0], [0, 0, 1, 0], [], []>} : vector<8x8xf32>, vector<8x8xf32>, vector<8x8xf32> -> vector<8x8xf32>
    "tpu.trace_stop"() : () -> ()
    %cst_28 = arith.constant dense<0xFF800000> : vector<8xf32>
    %86 = vector.multi_reduction <maximumf>, %85, %cst_28 [1] : vector<8x8xf32> to vector<8xf32>
    %87 = vector.shape_cast %86 : vector<8xf32> to vector<8x1xf32>
    %88 = vector.broadcast %87 : vector<8x1xf32> to vector<8x8xf32>
    %89 = arith.subf %85, %88 : vector<8x8xf32>
    %90 = math.exp %89 : vector<8x8xf32>
    %cst_29 = arith.constant dense<0.000000e+00> : vector<8xf32>
    %91 = vector.multi_reduction <add>, %90, %cst_29 [1] : vector<8x8xf32> to vector<8xf32>
    %92 = vector.shape_cast %91 : vector<8xf32> to vector<8x1xf32>
    %93 = tpu.reciprocal %92 : vector<8x1xf32> -> vector<8x1xf32>
    %94 = vector.broadcast %93 : vector<8x1xf32> to vector<8x8xf32>
    %95 = arith.mulf %90, %94 : vector<8x8xf32>
    %cst_30 = arith.constant dense<0.000000e+00> : vector<8x8xf32>
    %96 = tpu.matmul %95, %84, %cst_30 {dimension_numbers = #tpu.dot_dimension_numbers<[1], [0], [0], [1], [0, 0, 1, 1], [], []>} : vector<8x8xf32>, vector<8x8xf32>, vector<8x8xf32> -> vector<8x8xf32>
    %97 = vector.extract_strided_slice %4 {offsets = [8, 16], sizes = [8, 8], strides = [1, 1]} : vector<16x96xf32> to vector<8x8xf32>
    %98 = vector.extract_strided_slice %4 {offsets = [8, 48], sizes = [8, 8], strides = [1, 1]} : vector<16x96xf32> to vector<8x8xf32>
    %99 = vector.extract_strided_slice %4 {offsets = [8, 80], sizes = [8, 8], strides = [1, 1]} : vector<16x96xf32> to vector<8x8xf32>
    "tpu.trace_start"() <{level = 10 : i32, message = "td,sd->ts"}> : () -> ()
    %cst_31 = arith.constant dense<0.000000e+00> : vector<8x8xf32>
    %100 = tpu.matmul %97, %98, %cst_31 {dimension_numbers = #tpu.dot_dimension_numbers<[1], [1], [0], [0], [0, 0, 1, 0], [], []>} : vector<8x8xf32>, vector<8x8xf32>, vector<8x8xf32> -> vector<8x8xf32>
    "tpu.trace_stop"() : () -> ()
    %cst_32 = arith.constant dense<0xFF800000> : vector<8xf32>
    %101 = vector.multi_reduction <maximumf>, %100, %cst_32 [1] : vector<8x8xf32> to vector<8xf32>
    %102 = vector.shape_cast %101 : vector<8xf32> to vector<8x1xf32>
    %103 = vector.broadcast %102 : vector<8x1xf32> to vector<8x8xf32>
    %104 = arith.subf %100, %103 : vector<8x8xf32>
    %105 = math.exp %104 : vector<8x8xf32>
    %cst_33 = arith.constant dense<0.000000e+00> : vector<8xf32>
    %106 = vector.multi_reduction <add>, %105, %cst_33 [1] : vector<8x8xf32> to vector<8xf32>
    %107 = vector.shape_cast %106 : vector<8xf32> to vector<8x1xf32>
    %108 = tpu.reciprocal %107 : vector<8x1xf32> -> vector<8x1xf32>
    %109 = vector.broadcast %108 : vector<8x1xf32> to vector<8x8xf32>
    %110 = arith.mulf %105, %109 : vector<8x8xf32>
    %cst_34 = arith.constant dense<0.000000e+00> : vector<8x8xf32>
    %111 = tpu.matmul %110, %99, %cst_34 {dimension_numbers = #tpu.dot_dimension_numbers<[1], [0], [0], [1], [0, 0, 1, 1], [], []>} : vector<8x8xf32>, vector<8x8xf32>, vector<8x8xf32> -> vector<8x8xf32>
    %112 = vector.extract_strided_slice %4 {offsets = [8, 24], sizes = [8, 8], strides = [1, 1]} : vector<16x96xf32> to vector<8x8xf32>
    %113 = vector.extract_strided_slice %4 {offsets = [8, 56], sizes = [8, 8], strides = [1, 1]} : vector<16x96xf32> to vector<8x8xf32>
    %114 = vector.extract_strided_slice %4 {offsets = [8, 88], sizes = [8, 8], strides = [1, 1]} : vector<16x96xf32> to vector<8x8xf32>
    "tpu.trace_start"() <{level = 10 : i32, message = "td,sd->ts"}> : () -> ()
    %cst_35 = arith.constant dense<0.000000e+00> : vector<8x8xf32>
    %115 = tpu.matmul %112, %113, %cst_35 {dimension_numbers = #tpu.dot_dimension_numbers<[1], [1], [0], [0], [0, 0, 1, 0], [], []>} : vector<8x8xf32>, vector<8x8xf32>, vector<8x8xf32> -> vector<8x8xf32>
    "tpu.trace_stop"() : () -> ()
    %cst_36 = arith.constant dense<0xFF800000> : vector<8xf32>
    %116 = vector.multi_reduction <maximumf>, %115, %cst_36 [1] : vector<8x8xf32> to vector<8xf32>
    %117 = vector.shape_cast %116 : vector<8xf32> to vector<8x1xf32>
    %118 = vector.broadcast %117 : vector<8x1xf32> to vector<8x8xf32>
    %119 = arith.subf %115, %118 : vector<8x8xf32>
    %120 = math.exp %119 : vector<8x8xf32>
    %cst_37 = arith.constant dense<0.000000e+00> : vector<8xf32>
    %121 = vector.multi_reduction <add>, %120, %cst_37 [1] : vector<8x8xf32> to vector<8xf32>
    %122 = vector.shape_cast %121 : vector<8xf32> to vector<8x1xf32>
    %123 = tpu.reciprocal %122 : vector<8x1xf32> -> vector<8x1xf32>
    %124 = vector.broadcast %123 : vector<8x1xf32> to vector<8x8xf32>
    %125 = arith.mulf %120, %124 : vector<8x8xf32>
    %cst_38 = arith.constant dense<0.000000e+00> : vector<8x8xf32>
    %126 = tpu.matmul %125, %114, %cst_38 {dimension_numbers = #tpu.dot_dimension_numbers<[1], [0], [0], [1], [0, 0, 1, 1], [], []>} : vector<8x8xf32>, vector<8x8xf32>, vector<8x8xf32> -> vector<8x8xf32>
    %127 = tpu.concatenate %81, %96, %111, %126 in 1 : vector<8x8xf32>, vector<8x8xf32>, vector<8x8xf32>, vector<8x8xf32> -> vector<8x32xf32>
    %128 = tpu.concatenate %80, %95, %110, %125 in 1 : vector<8x8xf32>, vector<8x8xf32>, vector<8x8xf32>, vector<8x8xf32> -> vector<8x32xf32>
    %129 = tpu.concatenate %65, %127 in 0 : vector<8x32xf32>, vector<8x32xf32> -> vector<16x32xf32>
    %cst_39 = arith.constant dense<0.000000e+00> : vector<16x32xf32>
    %130 = tpu.matmul %129, %2, %cst_39 {dimension_numbers = #tpu.dot_dimension_numbers<[1], [0], [0], [1], [0, 0, 1, 1], [], []>} : vector<16x32xf32>, vector<32x32xf32>, vector<16x32xf32> -> vector<16x32xf32>
    %131 = vector.broadcast %3 : vector<1x32xf32> to vector<16x32xf32>
    %132 = arith.addf %130, %131 : vector<16x32xf32>
    %c0_40 = arith.constant 0 : index
    %c0_41 = arith.constant 0 : index
    %133 = vector.load %arg4[%c0_40, %c0_41] : memref<16x32xf32, #tpu.memory_space<vmem>>, vector<16x32xf32>
    tpu.vector_store %arg4[%c0_40, %c0_41], %132 {strides = array<i32>} : memref<16x32xf32, #tpu.memory_space<vmem>>, vector<16x32xf32>,
    %134 = tpu.concatenate %66, %128 in 0 : vector<8x32xf32>, vector<8x32xf32> -> vector<16x32xf32>
    %c0_42 = arith.constant 0 : index
    %c0_43 = arith.constant 0 : index
    %135 = vector.load %arg5[%c0_42, %c0_43] : memref<16x32xf32, #tpu.memory_space<vmem>>, vector<16x32xf32>
    tpu.vector_store %arg5[%c0_42, %c0_43], %134 {strides = array<i32>} : memref<16x32xf32, #tpu.memory_space<vmem>>, vector<16x32xf32>,
    return
  }
}

</mosaic_0001>

<llo_original>
// kernel: tpu_custom_call.1
$region0: #{tpu_custom_call.1}
  #allocation0 [shape = 'u32[]', space=smem, size = 0x4, offset = 0x4, fixed_abs, tag = 'smem constant byte address 0x4 - core index']
  #allocation1 [shape = 'u32[72,128]{1,0:T(1,128)}', space=vmem, size = 0x9000, scoped, tag = 'internal scratch']
  %s0 = inlined_call_operand.hbm [shape: f32[16,32], index: 0, kind: input, shape index: {}]
  %s1 = inlined_call_operand.hbm [shape: f32[32,96], index: 1, kind: input, shape index: {}]
  %s2 = inlined_call_operand.hbm [shape: f32[32,32], index: 2, kind: input, shape index: {}]
  %s3 = inlined_call_operand.vmem [shape: f32[1,32], index: 3, kind: input, shape index: {}]
  %s4 = inlined_call_operand.hbm [shape: f32[16,32], index: 4, kind: output, shape index: {0}]
  %s5 = inlined_call_operand.hbm [shape: f32[16,32], index: 5, kind: output, shape index: {1}]
  %6 = xla_tuple %s4, %s5
  %s7 = sld [smem:[#allocation0]]
  $region46: #{tpu_custom_call.1} parent=0
    _
  %s9 = ssub.s32 1, %s7
  %s10 = scalar_select 0, %s9, %s7
  $region1: #{tpu_custom_call.1} parent=0
    #allocation2 [shape = 'u8[8192]{0}', space=vmem, size = 0x2000, scoped, tag = 'input window, operand 0, single buffered']
    #allocation3 [shape = 's32[1]{0}', space=sflag, size = 0x4, scoped, tag = 'scoped memory for tpu_custom_call.1']
    #allocation4 [shape = 's32[1]{0}', space=sflag, size = 0x4, scoped, tag = 'scoped memory for tpu_custom_call.1']
    #allocation5 [shape = 'u8[16384]{0}', space=vmem, size = 0x4000, scoped, tag = 'input window, operand 1, single buffered']
    #allocation6 [shape = 's32[1]{0}', space=sflag, size = 0x4, scoped, tag = 'scoped memory for tpu_custom_call.1']
    #allocation7 [shape = 'u8[16384]{0}', space=vmem, size = 0x4000, scoped, tag = 'input window, operand 2, single buffered']
    #allocation8 [shape = 'u8[8192]{0}', space=vmem, size = 0x2000, scoped, tag = 'output window, operand 0, single buffered']
    #allocation9 [shape = 'u8[8192]{0}', space=vmem, size = 0x2000, scoped, tag = 'output window, operand 1, single buffered']
    #allocation10 [shape = 's32[1]{0}', space=sflag, size = 0x4, scoped, tag = 'scoped memory for tpu_custom_call.1']
    %11 = vsyncpa [#allocation3], 0
    %12 = vsyncpa [#allocation6], 0
    %13 = vsyncpa [#allocation4], 0
    %14 = vsyncpa [#allocation10], 0
    // Predicated region
    $region2: #{tpu_custom_call.1} parent=1 // pred_check
      _
    $region3: #{tpu_custom_call.1} parent=1 // pred_check_branch
      %16 = sbr.rel (0) target = $region5
    $region4: #{tpu_custom_call.1} parent=1 // pred_region
      %18 = vsyncadd [#allocation3], 0
      %s19 = sshll.u32 %s0, 4
      %s20 = int_to_ptr.hbm [resolvable:$true] %s19
      %s21 = sshll.u32 [#allocation2], 4
      %s22 = int_to_ptr.vmem [resolvable:$true] %s21
      %27 = dma.hbm_to_vmem [thread:$0]  %s20, 256, %s22, [#allocation3], 128, 128, 8
    $region5: #{tpu_custom_call.1} parent=1 // pred_fallthru
      _
    // Predicated region
    $region6: #{tpu_custom_call.1} parent=1 // pred_check
      _
    $region7: #{tpu_custom_call.1} parent=1 // pred_check_branch
      %29 = sbr.rel (0) target = $region9
    $region8: #{tpu_custom_call.1} parent=1 // pred_region
      %31 = vsyncadd [#allocation6], 0
      %s32 = sshll.u32 %s1, 4
      %s33 = int_to_ptr.hbm [resolvable:$true] %s32
      %s34 = sshll.u32 [#allocation5], 4
      %s35 = int_to_ptr.vmem [resolvable:$true] %s34
      %40 = dma.hbm_to_vmem [thread:$0]  %s33, 512, %s35, [#allocation6], 128, 128, 8
    $region9: #{tpu_custom_call.1} parent=1 // pred_fallthru
      _
    // Predicated region
    $region10: #{tpu_custom_call.1} parent=1 // pred_check
      _
    $region11: #{tpu_custom_call.1} parent=1 // pred_check_branch
      %42 = sbr.rel (0) target = $region13
    $region12: #{tpu_custom_call.1} parent=1 // pred_region
      %44 = vsyncadd [#allocation6], 0
      %s45 = sshll.u32 %s2, 4
      %s46 = int_to_ptr.hbm [resolvable:$true] %s45
      %s47 = sshll.u32 [#allocation7], 4
      %s48 = int_to_ptr.vmem [resolvable:$true] %s47
      %53 = dma.hbm_to_vmem [thread:$0]  %s46, 512, %s48, [#allocation6], 128, 128, 8
    $region13: #{tpu_custom_call.1} parent=1 // pred_fallthru
      _
    // Predicated region
    $region14: #{tpu_custom_call.1} parent=1 // pred_check
      _
    $region15: #{tpu_custom_call.1} parent=1 // pred_check_branch
      %55 = sbr.rel (0) target = $region17
    $region16: #{tpu_custom_call.1} parent=1 // pred_region
      _
    $region17: #{tpu_custom_call.1} parent=1 // pred_fallthru
      _
    // Predicated region
    $region18: #{tpu_custom_call.1} parent=1 // pred_check
      _
    $region19: #{tpu_custom_call.1} parent=1 // pred_check_branch
      %57 = sbr.rel (0) target = $region21
    $region20: #{tpu_custom_call.1} parent=1 // pred_region
      %59 = dma.done [#allocation3], 256
    $region21: #{tpu_custom_call.1} parent=1 // pred_fallthru
      _
    // Predicated region
    $region22: #{tpu_custom_call.1} parent=1 // pred_check
      _
    $region23: #{tpu_custom_call.1} parent=1 // pred_check_branch
      %61 = sbr.rel (0) target = $region25
    $region24: #{tpu_custom_call.1} parent=1 // pred_region
      %63 = dma.done [#allocation6], 512
    $region25: #{tpu_custom_call.1} parent=1 // pred_fallthru
      _
    // Predicated region
    $region26: #{tpu_custom_call.1} parent=1 // pred_check
      _
    $region27: #{tpu_custom_call.1} parent=1 // pred_check_branch
      %65 = sbr.rel (0) target = $region29
    $region28: #{tpu_custom_call.1} parent=1 // pred_region
      %67 = dma.done [#allocation6], 512
    $region29: #{tpu_custom_call.1} parent=1 // pred_fallthru
      _
    %v68 = vld [vmem:[#allocation2] sm:$0xff]
    %v69 = vld [vmem:[#allocation2 + $0x8] sm:$0xff]
    %v70 = vld [vmem:[#allocation5] sm:$0xff]
    %v71 = vld [vmem:[#allocation5 + $0x8] sm:$0xff]
    %v72 = vld [vmem:[#allocation5 + $0x10] sm:$0xff]
    %v73 = vld [vmem:[#allocation5 + $0x18] sm:$0xff]
    %v74 = vld [vmem:[#allocation7] sm:$0xff]
    %v75 = vld [vmem:[#allocation7 + $0x8] sm:$0xff]
    %v76 = vld [vmem:[#allocation7 + $0x10] sm:$0xff]
    %v77 = vld [vmem:[#allocation7 + $0x18] sm:$0xff]
    %v78 = vld [vmem:[%s3] sm:$0x1]
    %vm79 = vcmask 261120
    %v81 = vsel %vm79, %v68, 0
    %v84 = vsel %vm79, %v69, 0
    %86 = vmatpush.msra.mxu0 0.0
    %87 = vmatpush.msra.mxu0 0.0
    %88 = vmatpush.msra.mxu0 0.0
    %89 = vmatpush.msra.mxu0 0.0
    %90 = vmatpush.msra.mxu0 0.0
    %91 = vmatpush.msra.mxu0 0.0
    %92 = vmatpush.msra.mxu0 0.0
    %93 = vmatpush.msra.mxu0 0.0
    %94 = vmatpush.msra.mxu0 0.0
    %95 = vmatpush.msra.mxu0 0.0
    %96 = vmatpush.msra.mxu0 0.0
    %97 = vmatpush.msra.mxu0 0.0
    %98 = vmatpush.msra.mxu0 %v73
    %99 = vmatpush.msra.mxu0 %v72
    %100 = vmatpush.msra.mxu0 %v71
    %101 = vmatpush.msra.mxu0 %v70
    %102 = vmatmul.f32.gmra.mxu0 %v81
    %v103 = vpop.f32.mrf.mxu0
    %v104 = vadd.f32 0.0, %v103
    %105 = vmatmul.f32.gmra.mxu0 %v84
    %v106 = vpop.f32.mrf.mxu0
    %v107 = vadd.f32 0.0, %v106
    %108 = vdwg.mxu0
    %110 = vrot.lane.b32.xlu0 %v104, 96
    %v111 = vpop.permute.xlu0 %110
    %vm112 = vcmask 64512
    %v113 = vsel %vm112, %v104, 0
    %v115 = vsel %vm112, %v111, 0
    %117 = vmatpush.xpose.msra.mxu0 0.0
    %118 = vmatpush.xpose.msra.mxu0 0.0
    %119 = vmatpush.xpose.msra.mxu0 0.0
    %120 = vmatpush.xpose.msra.mxu0 0.0
    %121 = vmatpush.xpose.msra.mxu0 0.0
    %122 = vmatpush.xpose.msra.mxu0 0.0
    %123 = vmatpush.xpose.msra.mxu0 0.0
    %124 = vmatpush.xpose.msra.mxu0 0.0
    %125 = vmatpush.xpose.msra.mxu0 0.0
    %126 = vmatpush.xpose.msra.mxu0 0.0
    %127 = vmatpush.xpose.msra.mxu0 0.0
    %128 = vmatpush.xpose.msra.mxu0 0.0
    %129 = vmatpush.xpose.msra.mxu0 0.0
    %130 = vmatpush.xpose.msra.mxu0 0.0
    %131 = vmatpush.xpose.msra.mxu0 0.0
    %132 = vmatpush.xpose.msra.mxu0 %v115
    %133 = vmatmul.f32.gmra.mxu0 %v113
    %v134 = vpop.f32.mrf.mxu0
    %v135 = vadd.f32 0.0, %v134
    %136 = vdwg.mxu0
    %v137 = vsel %vm112, %v135, -inf
    %138 = vmax.xlane.f32.xlu0 %v137
    %v139 = vpop.xlane.xlu0 %138
    %v140 = vsub.f32 %v135, %v139
    %v141 = vmul.f32 %v140, 1.442695
    %v142 = vpow.pop %v141
    %v143 = vsel %vm112, %v142, 0.0
    %144 = vadd.xlane.f32.xlu0 %v143
    %v145 = vpop.xlane.xlu0 %144
    %v146 = vrcp.pop %v145
    %v147 = vmul.f32 %v145, %v146
    %v148 = vsub.f32 1.0, %v147
    %v149 = vmul.f32 %v146, %v148
    %v150 = vadd.f32 %v146, %v149
    %vm151 = vweird.f32 %v145
    %vm152 = vweird.f32 %v146
    %vm153 = vmor %vm151, %vm152
    %v154 = vsel %vm153, %v146, %v150
    %v155 = vand.u32 2147483647, %v145
    %vm156 = vcmp.eq.f32.partialorder %v155, 8.507059e+37
    %v157 = vand.u32 %v145, 2147483648
    %v158 = vor.u32 1.1754944e-38, %v157
    %v159 = vsel %vm156, %v158, %v154
    %v160 = vmul.f32 %v142, %v159
    %161 = vrot.lane.b32.xlu0 %v104, 64
    %v162 = vpop.permute.xlu0 %161
    %v165 = vsel %vm112, %v160, 0
    %167 = vmatpush.msra.mxu0 0.0
    %168 = vmatpush.msra.mxu0 0.0
    %169 = vmatpush.msra.mxu0 0.0
    %170 = vmatpush.msra.mxu0 0.0
    %171 = vmatpush.msra.mxu0 0.0
    %172 = vmatpush.msra.mxu0 0.0
    %173 = vmatpush.msra.mxu0 0.0
    %174 = vmatpush.msra.mxu0 0.0
    %175 = vmatpush.msra.mxu0 0.0
    %176 = vmatpush.msra.mxu0 0.0
    %177 = vmatpush.msra.mxu0 0.0
    %178 = vmatpush.msra.mxu0 0.0
    %179 = vmatpush.msra.mxu0 0.0
    %180 = vmatpush.msra.mxu0 0.0
    %181 = vmatpush.msra.mxu0 0.0
    %182 = vmatpush.msra.mxu0 %v162
    %183 = vmatmul.f32.gmra.mxu0 %v165
    %v184 = vpop.f32.mrf.mxu0
    %v185 = vadd.f32 0.0, %v184
    %186 = vdwg.mxu0
    %187 = vrot.lane.b32.xlu0 %v104, 120
    %v188 = vpop.permute.xlu0 %187
    %189 = vrot.lane.b32.xlu0 %v104, 88
    %v190 = vpop.permute.xlu0 %189
    %v191 = vsel %vm112, %v188, 0
    %v193 = vsel %vm112, %v190, 0
    %195 = vmatpush.xpose.msra.mxu0 0.0
    %196 = vmatpush.xpose.msra.mxu0 0.0
    %197 = vmatpush.xpose.msra.mxu0 0.0
    %198 = vmatpush.xpose.msra.mxu0 0.0
    %199 = vmatpush.xpose.msra.mxu0 0.0
    %200 = vmatpush.xpose.msra.mxu0 0.0
    %201 = vmatpush.xpose.msra.mxu0 0.0
    %202 = vmatpush.xpose.msra.mxu0 0.0
    %203 = vmatpush.xpose.msra.mxu0 0.0
    %204 = vmatpush.xpose.msra.mxu0 0.0
    %205 = vmatpush.xpose.msra.mxu0 0.0
    %206 = vmatpush.xpose.msra.mxu0 0.0
    %207 = vmatpush.xpose.msra.mxu0 0.0
    %208 = vmatpush.xpose.msra.mxu0 0.0
    %209 = vmatpush.xpose.msra.mxu0 0.0
    %210 = vmatpush.xpose.msra.mxu0 %v193
    %211 = vmatmul.f32.gmra.mxu0 %v191
    %v212 = vpop.f32.mrf.mxu0
    %v213 = vadd.f32 0.0, %v212
    %214 = vdwg.mxu0
    %v215 = vsel %vm112, %v213, -inf
    %216 = vmax.xlane.f32.xlu0 %v215
    %v217 = vpop.xlane.xlu0 %216
    %v218 = vsub.f32 %v213, %v217
    %v219 = vmul.f32 %v218, 1.442695
    %v220 = vpow.pop %v219
    %v221 = vsel %vm112, %v220, 0.0
    %222 = vadd.xlane.f32.xlu0 %v221
    %v223 = vpop.xlane.xlu0 %222
    %v224 = vrcp.pop %v223
    %v225 = vmul.f32 %v223, %v224
    %v226 = vsub.f32 1.0, %v225
    %v227 = vmul.f32 %v224, %v226
    %v228 = vadd.f32 %v224, %v227
    %vm229 = vweird.f32 %v223
    %vm230 = vweird.f32 %v224
    %vm231 = vmor %vm229, %vm230
    %v232 = vsel %vm231, %v224, %v228
    %v233 = vand.u32 2147483647, %v223
    %vm234 = vcmp.eq.f32.partialorder %v233, 8.507059e+37
    %v235 = vand.u32 %v223, 2147483648
    %v236 = vor.u32 1.1754944e-38, %v235
    %v237 = vsel %vm234, %v236, %v232
    %v238 = vmul.f32 %v220, %v237
    %239 = vrot.lane.b32.xlu0 %v104, 56
    %v240 = vpop.permute.xlu0 %239
    %v243 = vsel %vm112, %v238, 0
    %245 = vmatpush.msra.mxu0 0.0
    %246 = vmatpush.msra.mxu0 0.0
    %247 = vmatpush.msra.mxu0 0.0
    %248 = vmatpush.msra.mxu0 0.0
    %249 = vmatpush.msra.mxu0 0.0
    %250 = vmatpush.msra.mxu0 0.0
    %251 = vmatpush.msra.mxu0 0.0
    %252 = vmatpush.msra.mxu0 0.0
    %253 = vmatpush.msra.mxu0 0.0
    %254 = vmatpush.msra.mxu0 0.0
    %255 = vmatpush.msra.mxu0 0.0
    %256 = vmatpush.msra.mxu0 0.0
    %257 = vmatpush.msra.mxu0 0.0
    %258 = vmatpush.msra.mxu0 0.0
    %259 = vmatpush.msra.mxu0 0.0
    %260 = vmatpush.msra.mxu0 %v240
    %261 = vmatmul.f32.gmra.mxu0 %v243
    %v262 = vpop.f32.mrf.mxu0
    %v263 = vadd.f32 0.0, %v262
    %264 = vdwg.mxu0
    %265 = vrot.lane.b32.xlu0 %v104, 112
    %v266 = vpop.permute.xlu0 %265
    %267 = vrot.lane.b32.xlu0 %v104, 80
    %v268 = vpop.permute.xlu0 %267
    %v269 = vsel %vm112, %v266, 0
    %v271 = vsel %vm112, %v268, 0
    %273 = vmatpush.xpose.msra.mxu0 0.0
    %274 = vmatpush.xpose.msra.mxu0 0.0
    %275 = vmatpush.xpose.msra.mxu0 0.0
    %276 = vmatpush.xpose.msra.mxu0 0.0
    %277 = vmatpush.xpose.msra.mxu0 0.0
    %278 = vmatpush.xpose.msra.mxu0 0.0
    %279 = vmatpush.xpose.msra.mxu0 0.0
    %280 = vmatpush.xpose.msra.mxu0 0.0
    %281 = vmatpush.xpose.msra.mxu0 0.0
    %282 = vmatpush.xpose.msra.mxu0 0.0
    %283 = vmatpush.xpose.msra.mxu0 0.0
    %284 = vmatpush.xpose.msra.mxu0 0.0
    %285 = vmatpush.xpose.msra.mxu0 0.0
    %286 = vmatpush.xpose.msra.mxu0 0.0
    %287 = vmatpush.xpose.msra.mxu0 0.0
    %288 = vmatpush.xpose.msra.mxu0 %v271
    %289 = vmatmul.f32.gmra.mxu0 %v269
    %v290 = vpop.f32.mrf.mxu0
    %v291 = vadd.f32 0.0, %v290
    %292 = vdwg.mxu0
    %v293 = vsel %vm112, %v291, -inf
    %294 = vmax.xlane.f32.xlu0 %v293
    %v295 = vpop.xlane.xlu0 %294
    %v296 = vsub.f32 %v291, %v295
    %v297 = vmul.f32 %v296, 1.442695
    %v298 = vpow.pop %v297
    %v299 = vsel %vm112, %v298, 0.0
    %300 = vadd.xlane.f32.xlu0 %v299
    %v301 = vpop.xlane.xlu0 %300
    %v302 = vrcp.pop %v301
    %v303 = vmul.f32 %v301, %v302
    %v304 = vsub.f32 1.0, %v303
    %v305 = vmul.f32 %v302, %v304
    %v306 = vadd.f32 %v302, %v305
    %vm307 = vweird.f32 %v301
    %vm308 = vweird.f32 %v302
    %vm309 = vmor %vm307, %vm308
    %v310 = vsel %vm309, %v302, %v306
    %v311 = vand.u32 2147483647, %v301
    %vm312 = vcmp.eq.f32.partialorder %v311, 8.507059e+37
    %v313 = vand.u32 %v301, 2147483648
    %v314 = vor.u32 1.1754944e-38, %v313
    %v315 = vsel %vm312, %v314, %v310
    %v316 = vmul.f32 %v298, %v315
    %317 = vrot.lane.b32.xlu0 %v104, 48
    %v318 = vpop.permute.xlu0 %317
    %v321 = vsel %vm112, %v316, 0
    %323 = vmatpush.msra.mxu0 0.0
    %324 = vmatpush.msra.mxu0 0.0
    %325 = vmatpush.msra.mxu0 0.0
    %326 = vmatpush.msra.mxu0 0.0
    %327 = vmatpush.msra.mxu0 0.0
    %328 = vmatpush.msra.mxu0 0.0
    %329 = vmatpush.msra.mxu0 0.0
    %330 = vmatpush.msra.mxu0 0.0
    %331 = vmatpush.msra.mxu0 0.0
    %332 = vmatpush.msra.mxu0 0.0
    %333 = vmatpush.msra.mxu0 0.0
    %334 = vmatpush.msra.mxu0 0.0
    %335 = vmatpush.msra.mxu0 0.0
    %336 = vmatpush.msra.mxu0 0.0
    %337 = vmatpush.msra.mxu0 0.0
    %338 = vmatpush.msra.mxu0 %v318
    %339 = vmatmul.f32.gmra.mxu0 %v321
    %v340 = vpop.f32.mrf.mxu0
    %v341 = vadd.f32 0.0, %v340
    %342 = vdwg.mxu0
    %343 = vrot.lane.b32.xlu0 %v104, 104
    %v344 = vpop.permute.xlu0 %343
    %345 = vrot.lane.b32.xlu0 %v104, 72
    %v346 = vpop.permute.xlu0 %345
    %v347 = vsel %vm112, %v344, 0
    %v349 = vsel %vm112, %v346, 0
    %351 = vmatpush.xpose.msra.mxu0 0.0
    %352 = vmatpush.xpose.msra.mxu0 0.0
    %353 = vmatpush.xpose.msra.mxu0 0.0
    %354 = vmatpush.xpose.msra.mxu0 0.0
    %355 = vmatpush.xpose.msra.mxu0 0.0
    %356 = vmatpush.xpose.msra.mxu0 0.0
    %357 = vmatpush.xpose.msra.mxu0 0.0
    %358 = vmatpush.xpose.msra.mxu0 0.0
    %359 = vmatpush.xpose.msra.mxu0 0.0
    %360 = vmatpush.xpose.msra.mxu0 0.0
    %361 = vmatpush.xpose.msra.mxu0 0.0
    %362 = vmatpush.xpose.msra.mxu0 0.0
    %363 = vmatpush.xpose.msra.mxu0 0.0
    %364 = vmatpush.xpose.msra.mxu0 0.0
    %365 = vmatpush.xpose.msra.mxu0 0.0
    %366 = vmatpush.xpose.msra.mxu0 %v349
    %367 = vmatmul.f32.gmra.mxu0 %v347
    %v368 = vpop.f32.mrf.mxu0
    %v369 = vadd.f32 0.0, %v368
    %370 = vdwg.mxu0
    %v371 = vsel %vm112, %v369, -inf
    %372 = vmax.xlane.f32.xlu0 %v371
    %v373 = vpop.xlane.xlu0 %372
    %v374 = vsub.f32 %v369, %v373
    %v375 = vmul.f32 %v374, 1.442695
    %v376 = vpow.pop %v375
    %v377 = vsel %vm112, %v376, 0.0
    %378 = vadd.xlane.f32.xlu0 %v377
    %v379 = vpop.xlane.xlu0 %378
    %v380 = vrcp.pop %v379
    %v381 = vmul.f32 %v379, %v380
    %v382 = vsub.f32 1.0, %v381
    %v383 = vmul.f32 %v380, %v382
    %v384 = vadd.f32 %v380, %v383
    %vm385 = vweird.f32 %v379
    %vm386 = vweird.f32 %v380
    %vm387 = vmor %vm385, %vm386
    %v388 = vsel %vm387, %v380, %v384
    %v389 = vand.u32 2147483647, %v379
    %vm390 = vcmp.eq.f32.partialorder %v389, 8.507059e+37
    %v391 = vand.u32 %v379, 2147483648
    %v392 = vor.u32 1.1754944e-38, %v391
    %v393 = vsel %vm390, %v392, %v388
    %v394 = vmul.f32 %v376, %v393
    %395 = vrot.lane.b32.xlu0 %v104, 40
    %v396 = vpop.permute.xlu0 %395
    %v399 = vsel %vm112, %v394, 0
    %401 = vmatpush.msra.mxu0 0.0
    %402 = vmatpush.msra.mxu0 0.0
    %403 = vmatpush.msra.mxu0 0.0
    %404 = vmatpush.msra.mxu0 0.0
    %405 = vmatpush.msra.mxu0 0.0
    %406 = vmatpush.msra.mxu0 0.0
    %407 = vmatpush.msra.mxu0 0.0
    %408 = vmatpush.msra.mxu0 0.0
    %409 = vmatpush.msra.mxu0 0.0
    %410 = vmatpush.msra.mxu0 0.0
    %411 = vmatpush.msra.mxu0 0.0
    %412 = vmatpush.msra.mxu0 0.0
    %413 = vmatpush.msra.mxu0 0.0
    %414 = vmatpush.msra.mxu0 0.0
    %415 = vmatpush.msra.mxu0 0.0
    %416 = vmatpush.msra.mxu0 %v396
    %417 = vmatmul.f32.gmra.mxu0 %v399
    %v418 = vpop.f32.mrf.mxu0
    %v419 = vadd.f32 0.0, %v418
    %420 = vdwg.mxu0
    %422 = vrot.lane.b32.xlu0 %v263, 8
    %v423 = vpop.permute.xlu0 %422
    %426 = vrot.lane.b32.xlu0 %v341, 16
    %v427 = vpop.permute.xlu0 %426
    %430 = vrot.lane.b32.xlu0 %v419, 24
    %v431 = vpop.permute.xlu0 %430
    %v433 = vsel %vm112, %v185, %v423
    %vm434 = vcmask 130048
    %v435 = vsel %vm434, %v433, %v427
    %vm436 = vcmask 195584
    %v437 = vsel %vm436, %v435, %v431
    %438 = vrot.lane.b32.xlu0 %v238, 8
    %v439 = vpop.permute.xlu0 %438
    %441 = vrot.lane.b32.xlu0 %v316, 16
    %v442 = vpop.permute.xlu0 %441
    %444 = vrot.lane.b32.xlu0 %v394, 24
    %v445 = vpop.permute.xlu0 %444
    %v447 = vsel %vm112, %v160, %v439
    %v448 = vsel %vm434, %v447, %v442
    %v449 = vsel %vm436, %v448, %v445
    %451 = vrot.lane.b32.xlu0 %v107, 96
    %v452 = vpop.permute.xlu0 %451
    %v453 = vsel %vm112, %v107, 0
    %v455 = vsel %vm112, %v452, 0
    %457 = vmatpush.xpose.msra.mxu0 0.0
    %458 = vmatpush.xpose.msra.mxu0 0.0
    %459 = vmatpush.xpose.msra.mxu0 0.0
    %460 = vmatpush.xpose.msra.mxu0 0.0
    %461 = vmatpush.xpose.msra.mxu0 0.0
    %462 = vmatpush.xpose.msra.mxu0 0.0
    %463 = vmatpush.xpose.msra.mxu0 0.0
    %464 = vmatpush.xpose.msra.mxu0 0.0
    %465 = vmatpush.xpose.msra.mxu0 0.0
    %466 = vmatpush.xpose.msra.mxu0 0.0
    %467 = vmatpush.xpose.msra.mxu0 0.0
    %468 = vmatpush.xpose.msra.mxu0 0.0
    %469 = vmatpush.xpose.msra.mxu0 0.0
    %470 = vmatpush.xpose.msra.mxu0 0.0
    %471 = vmatpush.xpose.msra.mxu0 0.0
    %472 = vmatpush.xpose.msra.mxu0 %v455
    %473 = vmatmul.f32.gmra.mxu0 %v453
    %v474 = vpop.f32.mrf.mxu0
    %v475 = vadd.f32 0.0, %v474
    %476 = vdwg.mxu0
    %v477 = vsel %vm112, %v475, -inf
    %478 = vmax.xlane.f32.xlu0 %v477
    %v479 = vpop.xlane.xlu0 %478
    %v480 = vsub.f32 %v475, %v479
    %v481 = vmul.f32 %v480, 1.442695
    %v482 = vpow.pop %v481
    %v483 = vsel %vm112, %v482, 0.0
    %484 = vadd.xlane.f32.xlu0 %v483
    %v485 = vpop.xlane.xlu0 %484
    %v486 = vrcp.pop %v485
    %v487 = vmul.f32 %v485, %v486
    %v488 = vsub.f32 1.0, %v487
    %v489 = vmul.f32 %v486, %v488
    %v490 = vadd.f32 %v486, %v489
    %vm491 = vweird.f32 %v485
    %vm492 = vweird.f32 %v486
    %vm493 = vmor %vm491, %vm492
    %v494 = vsel %vm493, %v486, %v490
    %v495 = vand.u32 2147483647, %v485
    %vm496 = vcmp.eq.f32.partialorder %v495, 8.507059e+37
    %v497 = vand.u32 %v485, 2147483648
    %v498 = vor.u32 1.1754944e-38, %v497
    %v499 = vsel %vm496, %v498, %v494
    %v500 = vmul.f32 %v482, %v499
    %501 = vrot.lane.b32.xlu0 %v107, 64
    %v502 = vpop.permute.xlu0 %501
    %v505 = vsel %vm112, %v500, 0
    %507 = vmatpush.msra.mxu0 0.0
    %508 = vmatpush.msra.mxu0 0.0
    %509 = vmatpush.msra.mxu0 0.0
    %510 = vmatpush.msra.mxu0 0.0
    %511 = vmatpush.msra.mxu0 0.0
    %512 = vmatpush.msra.mxu0 0.0
    %513 = vmatpush.msra.mxu0 0.0
    %514 = vmatpush.msra.mxu0 0.0
    %515 = vmatpush.msra.mxu0 0.0
    %516 = vmatpush.msra.mxu0 0.0
    %517 = vmatpush.msra.mxu0 0.0
    %518 = vmatpush.msra.mxu0 0.0
    %519 = vmatpush.msra.mxu0 0.0
    %520 = vmatpush.msra.mxu0 0.0
    %521 = vmatpush.msra.mxu0 0.0
    %522 = vmatpush.msra.mxu0 %v502
    %523 = vmatmul.f32.gmra.mxu0 %v505
    %v524 = vpop.f32.mrf.mxu0
    %v525 = vadd.f32 0.0, %v524
    %526 = vdwg.mxu0
    %527 = vrot.lane.b32.xlu0 %v107, 120
    %v528 = vpop.permute.xlu0 %527
    %529 = vrot.lane.b32.xlu0 %v107, 88
    %v530 = vpop.permute.xlu0 %529
    %v531 = vsel %vm112, %v528, 0
    %v533 = vsel %vm112, %v530, 0
    %535 = vmatpush.xpose.msra.mxu0 0.0
    %536 = vmatpush.xpose.msra.mxu0 0.0
    %537 = vmatpush.xpose.msra.mxu0 0.0
    %538 = vmatpush.xpose.msra.mxu0 0.0
    %539 = vmatpush.xpose.msra.mxu0 0.0
    %540 = vmatpush.xpose.msra.mxu0 0.0
    %541 = vmatpush.xpose.msra.mxu0 0.0
    %542 = vmatpush.xpose.msra.mxu0 0.0
    %543 = vmatpush.xpose.msra.mxu0 0.0
    %544 = vmatpush.xpose.msra.mxu0 0.0
    %545 = vmatpush.xpose.msra.mxu0 0.0
    %546 = vmatpush.xpose.msra.mxu0 0.0
    %547 = vmatpush.xpose.msra.mxu0 0.0
    %548 = vmatpush.xpose.msra.mxu0 0.0
    %549 = vmatpush.xpose.msra.mxu0 0.0
    %550 = vmatpush.xpose.msra.mxu0 %v533
    %551 = vmatmul.f32.gmra.mxu0 %v531
    %v552 = vpop.f32.mrf.mxu0
    %v553 = vadd.f32 0.0, %v552
    %554 = vdwg.mxu0
    %v555 = vsel %vm112, %v553, -inf
    %556 = vmax.xlane.f32.xlu0 %v555
    %v557 = vpop.xlane.xlu0 %556
    %v558 = vsub.f32 %v553, %v557
    %v559 = vmul.f32 %v558, 1.442695
    %v560 = vpow.pop %v559
    %v561 = vsel %vm112, %v560, 0.0
    %562 = vadd.xlane.f32.xlu0 %v561
    %v563 = vpop.xlane.xlu0 %562
    %v564 = vrcp.pop %v563
    %v565 = vmul.f32 %v563, %v564
    %v566 = vsub.f32 1.0, %v565
    %v567 = vmul.f32 %v564, %v566
    %v568 = vadd.f32 %v564, %v567
    %vm569 = vweird.f32 %v563
    %vm570 = vweird.f32 %v564
    %vm571 = vmor %vm569, %vm570
    %v572 = vsel %vm571, %v564, %v568
    %v573 = vand.u32 2147483647, %v563
    %vm574 = vcmp.eq.f32.partialorder %v573, 8.507059e+37
    %v575 = vand.u32 %v563, 2147483648
    %v576 = vor.u32 1.1754944e-38, %v575
    %v577 = vsel %vm574, %v576, %v572
    %v578 = vmul.f32 %v560, %v577
    %579 = vrot.lane.b32.xlu0 %v107, 56
    %v580 = vpop.permute.xlu0 %579
    %v583 = vsel %vm112, %v578, 0
    %585 = vmatpush.msra.mxu0 0.0
    %586 = vmatpush.msra.mxu0 0.0
    %587 = vmatpush.msra.mxu0 0.0
    %588 = vmatpush.msra.mxu0 0.0
    %589 = vmatpush.msra.mxu0 0.0
    %590 = vmatpush.msra.mxu0 0.0
    %591 = vmatpush.msra.mxu0 0.0
    %592 = vmatpush.msra.mxu0 0.0
    %593 = vmatpush.msra.mxu0 0.0
    %594 = vmatpush.msra.mxu0 0.0
    %595 = vmatpush.msra.mxu0 0.0
    %596 = vmatpush.msra.mxu0 0.0
    %597 = vmatpush.msra.mxu0 0.0
    %598 = vmatpush.msra.mxu0 0.0
    %599 = vmatpush.msra.mxu0 0.0
    %600 = vmatpush.msra.mxu0 %v580
    %601 = vmatmul.f32.gmra.mxu0 %v583
    %v602 = vpop.f32.mrf.mxu0
    %v603 = vadd.f32 0.0, %v602
    %604 = vdwg.mxu0
    %605 = vrot.lane.b32.xlu0 %v107, 112
    %v606 = vpop.permute.xlu0 %605
    %607 = vrot.lane.b32.xlu0 %v107, 80
    %v608 = vpop.permute.xlu0 %607
    %v609 = vsel %vm112, %v606, 0
    %v611 = vsel %vm112, %v608, 0
    %613 = vmatpush.xpose.msra.mxu0 0.0
    %614 = vmatpush.xpose.msra.mxu0 0.0
    %615 = vmatpush.xpose.msra.mxu0 0.0
    %616 = vmatpush.xpose.msra.mxu0 0.0
    %617 = vmatpush.xpose.msra.mxu0 0.0
    %618 = vmatpush.xpose.msra.mxu0 0.0
    %619 = vmatpush.xpose.msra.mxu0 0.0
    %620 = vmatpush.xpose.msra.mxu0 0.0
    %621 = vmatpush.xpose.msra.mxu0 0.0
    %622 = vmatpush.xpose.msra.mxu0 0.0
    %623 = vmatpush.xpose.msra.mxu0 0.0
    %624 = vmatpush.xpose.msra.mxu0 0.0
    %625 = vmatpush.xpose.msra.mxu0 0.0
    %626 = vmatpush.xpose.msra.mxu0 0.0
    %627 = vmatpush.xpose.msra.mxu0 0.0
    %628 = vmatpush.xpose.msra.mxu0 %v611
    %629 = vmatmul.f32.gmra.mxu0 %v609
    %v630 = vpop.f32.mrf.mxu0
    %v631 = vadd.f32 0.0, %v630
    %632 = vdwg.mxu0
    %v633 = vsel %vm112, %v631, -inf
    %634 = vmax.xlane.f32.xlu0 %v633
    %v635 = vpop.xlane.xlu0 %634
    %v636 = vsub.f32 %v631, %v635
    %v637 = vmul.f32 %v636, 1.442695
    %v638 = vpow.pop %v637
    %v639 = vsel %vm112, %v638, 0.0
    %640 = vadd.xlane.f32.xlu0 %v639
    %v641 = vpop.xlane.xlu0 %640
    %v642 = vrcp.pop %v641
    %v643 = vmul.f32 %v641, %v642
    %v644 = vsub.f32 1.0, %v643
    %v645 = vmul.f32 %v642, %v644
    %v646 = vadd.f32 %v642, %v645
    %vm647 = vweird.f32 %v641
    %vm648 = vweird.f32 %v642
    %vm649 = vmor %vm647, %vm648
    %v650 = vsel %vm649, %v642, %v646
    %v651 = vand.u32 2147483647, %v641
    %vm652 = vcmp.eq.f32.partialorder %v651, 8.507059e+37
    %v653 = vand.u32 %v641, 2147483648
    %v654 = vor.u32 1.1754944e-38, %v653
    %v655 = vsel %vm652, %v654, %v650
    %v656 = vmul.f32 %v638, %v655
    %657 = vrot.lane.b32.xlu0 %v107, 48
    %v658 = vpop.permute.xlu0 %657
    %v661 = vsel %vm112, %v656, 0
    %663 = vmatpush.msra.mxu0 0.0
    %664 = vmatpush.msra.mxu0 0.0
    %665 = vmatpush.msra.mxu0 0.0
    %666 = vmatpush.msra.mxu0 0.0
    %667 = vmatpush.msra.mxu0 0.0
    %668 = vmatpush.msra.mxu0 0.0
    %669 = vmatpush.msra.mxu0 0.0
    %670 = vmatpush.msra.mxu0 0.0
    %671 = vmatpush.msra.mxu0 0.0
    %672 = vmatpush.msra.mxu0 0.0
    %673 = vmatpush.msra.mxu0 0.0
    %674 = vmatpush.msra.mxu0 0.0
    %675 = vmatpush.msra.mxu0 0.0
    %676 = vmatpush.msra.mxu0 0.0
    %677 = vmatpush.msra.mxu0 0.0
    %678 = vmatpush.msra.mxu0 %v658
    %679 = vmatmul.f32.gmra.mxu0 %v661
    %v680 = vpop.f32.mrf.mxu0
    %v681 = vadd.f32 0.0, %v680
    %682 = vdwg.mxu0
    %683 = vrot.lane.b32.xlu0 %v107, 104
    %v684 = vpop.permute.xlu0 %683
    %685 = vrot.lane.b32.xlu0 %v107, 72
    %v686 = vpop.permute.xlu0 %685
    %v687 = vsel %vm112, %v684, 0
    %v689 = vsel %vm112, %v686, 0
    %691 = vmatpush.xpose.msra.mxu0 0.0
    %692 = vmatpush.xpose.msra.mxu0 0.0
    %693 = vmatpush.xpose.msra.mxu0 0.0
    %694 = vmatpush.xpose.msra.mxu0 0.0
    %695 = vmatpush.xpose.msra.mxu0 0.0
    %696 = vmatpush.xpose.msra.mxu0 0.0
    %697 = vmatpush.xpose.msra.mxu0 0.0
    %698 = vmatpush.xpose.msra.mxu0 0.0
    %699 = vmatpush.xpose.msra.mxu0 0.0
    %700 = vmatpush.xpose.msra.mxu0 0.0
    %701 = vmatpush.xpose.msra.mxu0 0.0
    %702 = vmatpush.xpose.msra.mxu0 0.0
    %703 = vmatpush.xpose.msra.mxu0 0.0
    %704 = vmatpush.xpose.msra.mxu0 0.0
    %705 = vmatpush.xpose.msra.mxu0 0.0
    %706 = vmatpush.xpose.msra.mxu0 %v689
    %707 = vmatmul.f32.gmra.mxu0 %v687
    %v708 = vpop.f32.mrf.mxu0
    %v709 = vadd.f32 0.0, %v708
    %710 = vdwg.mxu0
    %v711 = vsel %vm112, %v709, -inf
    %712 = vmax.xlane.f32.xlu0 %v711
    %v713 = vpop.xlane.xlu0 %712
    %v714 = vsub.f32 %v709, %v713
    %v715 = vmul.f32 %v714, 1.442695
    %v716 = vpow.pop %v715
    %v717 = vsel %vm112, %v716, 0.0
    %718 = vadd.xlane.f32.xlu0 %v717
    %v719 = vpop.xlane.xlu0 %718
    %v720 = vrcp.pop %v719
    %v721 = vmul.f32 %v719, %v720
    %v722 = vsub.f32 1.0, %v721
    %v723 = vmul.f32 %v720, %v722
    %v724 = vadd.f32 %v720, %v723
    %vm725 = vweird.f32 %v719
    %vm726 = vweird.f32 %v720
    %vm727 = vmor %vm725, %vm726
    %v728 = vsel %vm727, %v720, %v724
    %v729 = vand.u32 2147483647, %v719
    %vm730 = vcmp.eq.f32.partialorder %v729, 8.507059e+37
    %v731 = vand.u32 %v719, 2147483648
    %v732 = vor.u32 1.1754944e-38, %v731
    %v733 = vsel %vm730, %v732, %v728
    %v734 = vmul.f32 %v716, %v733
    %735 = vrot.lane.b32.xlu0 %v107, 40
    %v736 = vpop.permute.xlu0 %735
    %v739 = vsel %vm112, %v734, 0
    %741 = vmatpush.msra.mxu0 0.0
    %742 = vmatpush.msra.mxu0 0.0
    %743 = vmatpush.msra.mxu0 0.0
    %744 = vmatpush.msra.mxu0 0.0
    %745 = vmatpush.msra.mxu0 0.0
    %746 = vmatpush.msra.mxu0 0.0
    %747 = vmatpush.msra.mxu0 0.0
    %748 = vmatpush.msra.mxu0 0.0
    %749 = vmatpush.msra.mxu0 0.0
    %750 = vmatpush.msra.mxu0 0.0
    %751 = vmatpush.msra.mxu0 0.0
    %752 = vmatpush.msra.mxu0 0.0
    %753 = vmatpush.msra.mxu0 0.0
    %754 = vmatpush.msra.mxu0 0.0
    %755 = vmatpush.msra.mxu0 0.0
    %756 = vmatpush.msra.mxu0 %v736
    %757 = vmatmul.f32.gmra.mxu0 %v739
    %v758 = vpop.f32.mrf.mxu0
    %v759 = vadd.f32 0.0, %v758
    %760 = vdwg.mxu0
    %762 = vrot.lane.b32.xlu0 %v603, 8
    %v763 = vpop.permute.xlu0 %762
    %766 = vrot.lane.b32.xlu0 %v681, 16
    %v767 = vpop.permute.xlu0 %766
    %770 = vrot.lane.b32.xlu0 %v759, 24
    %v771 = vpop.permute.xlu0 %770
    %v773 = vsel %vm112, %v525, %v763
    %v774 = vsel %vm434, %v773, %v767
    %v775 = vsel %vm436, %v774, %v771
    %776 = vrot.lane.b32.xlu0 %v578, 8
    %v777 = vpop.permute.xlu0 %776
    %779 = vrot.lane.b32.xlu0 %v656, 16
    %v780 = vpop.permute.xlu0 %779
    %782 = vrot.lane.b32.xlu0 %v734, 24
    %v783 = vpop.permute.xlu0 %782
    %v785 = vsel %vm112, %v500, %v777
    %v786 = vsel %vm434, %v785, %v780
    %v787 = vsel %vm436, %v786, %v783
    %v789 = vperm.slane %v78, 0
    %v792 = vsel %vm79, %v437, 0
    %v795 = vsel %vm79, %v775, 0
    %797 = vmatpush.msra.mxu0 0.0
    %798 = vmatpush.msra.mxu0 0.0
    %799 = vmatpush.msra.mxu0 0.0
    %800 = vmatpush.msra.mxu0 0.0
    %801 = vmatpush.msra.mxu0 0.0
    %802 = vmatpush.msra.mxu0 0.0
    %803 = vmatpush.msra.mxu0 0.0
    %804 = vmatpush.msra.mxu0 0.0
    %805 = vmatpush.msra.mxu0 0.0
    %806 = vmatpush.msra.mxu0 0.0
    %807 = vmatpush.msra.mxu0 0.0
    %808 = vmatpush.msra.mxu0 0.0
    %809 = vmatpush.msra.mxu0 %v77
    %810 = vmatpush.msra.mxu0 %v76
    %811 = vmatpush.msra.mxu0 %v75
    %812 = vmatpush.msra.mxu0 %v74
    %813 = vmatmul.f32.gmra.mxu0 %v792
    %v814 = vpop.f32.mrf.mxu0
    %v815 = vadd.f32 %v789, %v814
    %816 = vmatmul.f32.gmra.mxu0 %v795
    %v817 = vpop.f32.mrf.mxu0
    %v818 = vadd.f32 %v789, %v817
    %819 = vdwg.mxu0
    %820 = vst.msk [vmem:[#allocation8] sm:$0xff] %vm79, %v815
    %821 = vst.msk [vmem:[#allocation8 + $0x8] sm:$0xff] %vm79, %v818
    %822 = vst.msk [vmem:[#allocation9] sm:$0xff] %vm79, %v449
    %823 = vst.msk [vmem:[#allocation9 + $0x8] sm:$0xff] %vm79, %v787
    // Predicated region
    $region30: #{tpu_custom_call.1} parent=1 // pred_check
      _
    $region31: #{tpu_custom_call.1} parent=1 // pred_check_branch
      %825 = sbr.rel (0) target = $region33
    $region32: #{tpu_custom_call.1} parent=1 // pred_region
      %827 = vsyncadd [#allocation4], 0
      %s828 = sshll.u32 [#allocation8], 4
      %s829 = int_to_ptr.vmem [resolvable:$true] %s828
      %s830 = sshll.u32 %s4, 4
      %s831 = int_to_ptr.hbm [resolvable:$true] %s830
      %836 = dma.vmem_to_hbm [thread:$0]  %s829, 256, %s831, [#allocation4], 128, 128, 8
    $region33: #{tpu_custom_call.1} parent=1 // pred_fallthru
      _
    // Predicated region
    $region34: #{tpu_custom_call.1} parent=1 // pred_check
      _
    $region35: #{tpu_custom_call.1} parent=1 // pred_check_branch
      %838 = sbr.rel (0) target = $region37
    $region36: #{tpu_custom_call.1} parent=1 // pred_region
      %840 = vsyncadd [#allocation10], 0
      %s841 = sshll.u32 [#allocation9], 4
      %s842 = int_to_ptr.vmem [resolvable:$true] %s841
      %s843 = sshll.u32 %s5, 4
      %s844 = int_to_ptr.hbm [resolvable:$true] %s843
      %849 = dma.vmem_to_hbm [thread:$0]  %s842, 256, %s844, [#allocation10], 128, 128, 8
    $region37: #{tpu_custom_call.1} parent=1 // pred_fallthru
      _
    // Predicated region
    $region38: #{tpu_custom_call.1} parent=1 // pred_check
      _
    $region39: #{tpu_custom_call.1} parent=1 // pred_check_branch
      %851 = sbr.rel (0) target = $region41
    $region40: #{tpu_custom_call.1} parent=1 // pred_region
      %853 = dma.done [#allocation4], 256
    $region41: #{tpu_custom_call.1} parent=1 // pred_fallthru
      _
    // Predicated region
    $region42: #{tpu_custom_call.1} parent=1 // pred_check
      _
    $region43: #{tpu_custom_call.1} parent=1 // pred_check_branch
      %855 = sbr.rel (0) target = $region45
    $region44: #{tpu_custom_call.1} parent=1 // pred_region
      %857 = dma.done [#allocation10], 256
    $region45: #{tpu_custom_call.1} parent=1 // pred_fallthru
      _
    %858 = vsyncpa [#allocation3], 1
    %859 = vsyncpa [#allocation6], 1
    %860 = vsyncpa [#allocation4], 1
    %861 = vsyncpa [#allocation10], 1

</llo_original>
